<compile_context>
chip_gen: v7x
topology: tpu7x:2x2x1
jax: 0.10.0
libtpu: 0.0.40
codegen_flags: <defaults>
</compile_context>

<pallas_src>
import math
import functools

import jax
import jax.numpy as jnp
from jax.experimental import pallas as pl
from jax.experimental.pallas import tpu as pltpu

_LANE = 128


def _round_up(x: int, m: int) -> int:
    return ((x + m - 1) // m) * m


def _build_pe_table(vec_dim: int, max_seq_len: int, dtype=jnp.float32) -> jnp.ndarray:
    """PE table reproducing the PyTorch __init__ double loop exactly.

    NOTE: the original module uses the *raw even index i* in the exponent,
    i.e. 10000 ** (2 * i / vec_dim) with i = 0, 2, 4, ...  We reproduce that
    quirk faithfully.  vec_dim must be even (the PyTorch loop writes pe[pos, i+1]).
    """
    assert vec_dim % 2 == 0, "vec_dim must be even (as in the PyTorch module)"
    pos = jnp.arange(max_seq_len, dtype=jnp.float32)[:, None]          # (S, 1)
    i_even = jnp.arange(0, vec_dim, 2, dtype=jnp.float32)[None, :]     # (1, D/2)
    denom = jnp.power(10000.0, 2.0 * i_even / float(vec_dim))          # (1, D/2)
    angles = pos / denom                                               # (S, D/2)
    pe = jnp.stack([jnp.sin(angles), jnp.cos(angles)], axis=-1)        # (S, D/2, 2)
    pe = pe.reshape(max_seq_len, vec_dim)                              # even=sin, odd=cos
    return pe.astype(dtype)[None, :, :]                                # (1, S, D)


def _pos_enc_kernel(x_ref, pe_ref, o_ref, *, scale):
    # Memory-bound broadcast-add, fully in VMEM.
    # x_ref/o_ref: (br_b, br_r, L)   pe_ref: (1, br_r, L) -> broadcast over batch.
    x = x_ref[...].astype(jnp.float32)
    o_ref[...] = (scale * x + pe_ref[...]).astype(o_ref.dtype)


def _largest_divisor(full: int, cap: int) -> int:
    """Largest d <= cap dividing full (>= 1)."""
    d = max(1, min(full, cap))
    while d > 1 and full % d:
        d -= 1
    return d


def _largest_aligned_divisor(full: int, unit: int, cap: int) -> int:
    """Largest d <= cap with d % unit == 0 and full % d == 0.

    Assumes full % unit == 0; falls back to `unit` (never to `full`), so it can
    never produce a pathological oversized block.
    """
    d = (max(unit, min(full, cap)) // unit) * unit
    while d > unit and full % d:
        d -= unit
    return d


def _choose_layout(N: int, sublane_unit: int):
    """Return (R, L, N_pad): per-batch-row layout (R, L) with L % 128 == 0.

    For all but tiny rows, N is padded to a multiple of L * sublane_unit so the
    middle dim R is a multiple of the dtype's native sublane tile (no hidden
    padding and always a legal aligned divisor for br_r).
    """
    if N <= _LANE * sublane_unit:            # tiny row: a single lane-aligned chunk
        L = _round_up(N, _LANE)
        return 1, L, L
    L = 4 * _LANE                            # 512 lanes by default
    while L > _LANE and N < L * sublane_unit:
        L //= 2
    chunk = L * sublane_unit
    n_pad = _round_up(N, chunk)
    return n_pad // L, L, n_pad


def _pick_blocks(B, R, L, x_item, out_item, sublane_unit, target_bytes):
    """Return (br_b, br_r, vmem_needed). All sizes use (sublane,128)-padded bytes."""
    l_phys = _round_up(L, _LANE)
    rows_budget = max(sublane_unit, target_bytes // (l_phys * x_item))
    if R <= rows_budget:
        br_r = R                              # full dim -> always legal
    else:
        br_r = _largest_aligned_divisor(R, sublane_unit, rows_budget)
    r_phys = _round_up(br_r, sublane_unit)
    row_bytes = r_phys * l_phys * x_item
    br_b = _largest_divisor(B, max(1, target_bytes // row_bytes))

    x_blk = br_b * r_phys * l_phys * x_item
    out_blk = br_b * r_phys * l_phys * out_item
    pe_blk = _round_up(br_r, 8) * l_phys * 4          # pe stays float32
    vmem_needed = 2 * (x_blk + out_blk + pe_blk)      # double-buffered in/out/pe
    return br_b, br_r, vmem_needed


def positional_encoder(x: jnp.ndarray, pe: jnp.ndarray) -> jnp.ndarray:
    """ret = sqrt(vec_dim) * x + pe, matching PositionalEncoder.forward."""
    B, S, D = x.shape
    # The PyTorch forward adds the *full* pe buffer (no slicing), so the input
    # sequence length must equal max_seq_len.
    assert pe.shape == (1, S, D), "x seq_len must equal max_seq_len"
    scale = math.sqrt(D)

    # PyTorch keeps pe in float32 and promotes the sum; match that exactly.
    pe = pe.astype(jnp.float32)
    out_dtype = jnp.result_type(x.dtype, jnp.float32)

    x_item = jnp.dtype(x.dtype).itemsize
    out_item = jnp.dtype(out_dtype).itemsize
    sublane_unit = max(8, 32 // x_item)       # 8 for f32, 16 for bf16, 32 for int8/fp8

    # Lane-dense 3D view (B, R, L).
    N = S * D
    R, L, N_pad = _choose_layout(N, sublane_unit)

    # Target ~8 MiB per x tile; shrink until the padded, double-buffered
    # footprint (x + out + pe) stays well inside VMEM on every generation
    # (v7x: 64 MiB physical).
    target = 8 << 20
    while True:
        br_b, br_r, vmem_needed = _pick_blocks(
            B, R, L, x_item, out_item, sublane_unit, target)
        if vmem_needed <= (40 << 20) or target <= (1 << 20):
            break
        target //= 2
    vmem_limit = min(max(vmem_needed + (8 << 20), 16 << 20), 112 << 20)

    x2 = x.reshape(B, N)
    pe2 = pe.reshape(1, N)
    if N_pad != N:
        # TODO(synk): the zero-pad copies x once in HBM; only hit when N is not
        # a multiple of the (sublane, 128) chunk.
        x2 = jnp.pad(x2, ((0, 0), (0, N_pad - N)))
        pe2 = jnp.pad(pe2, ((0, 0), (0, N_pad - N)))
    x3 = x2.reshape(B, R, L)
    pe3 = pe2.reshape(1, R, L)

    # Batch tiles are the *last* (fastest) grid axis, so the PE block index
    # (0, j, 0) is constant across the inner loop and Pallas does not re-DMA it.
    grid = (R // br_r, B // br_b)

    kernel = functools.partial(_pos_enc_kernel, scale=scale)
    out3 = pl.pallas_call(
        kernel,
        out_shape=jax.ShapeDtypeStruct((B, R, L), out_dtype),
        grid_spec=pltpu.PrefetchScalarGridSpec(
            num_scalar_prefetch=0,
            grid=grid,
            in_specs=[
                pl.BlockSpec((br_b, br_r, L), lambda j, i: (i, j, 0)),  # x tile
                pl.BlockSpec((1, br_r, L), lambda j, i: (0, j, 0)),     # shared PE
            ],
            out_specs=pl.BlockSpec((br_b, br_r, L), lambda j, i: (i, j, 0)),
        ),
        compiler_params=pltpu.CompilerParams(
            # Pure elementwise: both grid axes are independent (megacore on v7x).
            dimension_semantics=("parallel", "parallel"),
            # Derived from the actual padded, double-buffered block footprint.
            vmem_limit_bytes=vmem_limit,
        ),
    )(x3, pe3)

    out = out3.reshape(B, N_pad)
    if N_pad != N:
        out = out[:, :N]
    return out.reshape(B, S, D)


if __name__ == "__main__":
    vec_dim = 32
    max_seq_len = 8
    batch = 2

    key = jax.random.PRNGKey(0)
    x = jax.random.normal(key, (batch, max_seq_len, vec_dim), dtype=jnp.float32)

    pe = _build_pe_table(vec_dim, max_seq_len, dtype=jnp.float32)

    out = positional_encoder(x, pe)
    out = jax.block_until_ready(out)

    # correctness check against plain-JAX reference of the PyTorch forward
    ref = math.sqrt(vec_dim) * x + pe
    assert out.dtype == ref.dtype, "dtype mismatch vs reference"
    assert jnp.allclose(out, ref, atol=1e-5, rtol=1e-5), "mismatch vs reference"

    print("KERNEL_OK")
</pallas_src>

<mosaic_0001>
module attributes {stable_mosaic.version = 11 : i64} {
  func.func @_pos_enc_kernel(%arg0: i32, %arg1: i32, %arg2: memref<2x1x256xf32, #tpu.memory_space<vmem>>, %arg3: memref<1x1x256xf32, #tpu.memory_space<vmem>>, %arg4: memref<2x1x256xf32, #tpu.memory_space<vmem>>) attributes {dimension_semantics = [#tpu.dimension_semantics<parallel>, #tpu.dimension_semantics<parallel>], iteration_bounds = array<i64: 1, 1>, scalar_prefetch = 0 : i64, scratch_operands = 0 : i64, tpu.core_type = #tpu.core_type<tc>, window_params = [{transform_indices = @transform_0, window_bounds = array<i64: 2, 1, 256>}, {transform_indices = @transform_1, window_bounds = array<i64: 1, 1, 256>}, {transform_indices = @transform_2, window_bounds = array<i64: 2, 1, 256>}]} {
    %c0 = arith.constant 0 : index
    %c0_0 = arith.constant 0 : index
    %c0_1 = arith.constant 0 : index
    %0 = vector.load %arg2[%c0, %c0_0, %c0_1] : memref<2x1x256xf32, #tpu.memory_space<vmem>>, vector<2x1x256xf32>
    %cst = arith.constant 5.65685415 : f32
    %1 = vector.broadcast %cst : f32 to vector<2x1x256xf32>
    %2 = arith.mulf %1, %0 : vector<2x1x256xf32>
    %c0_2 = arith.constant 0 : index
    %c0_3 = arith.constant 0 : index
    %c0_4 = arith.constant 0 : index
    %3 = vector.load %arg3[%c0_2, %c0_3, %c0_4] : memref<1x1x256xf32, #tpu.memory_space<vmem>>, vector<1x1x256xf32>
    %4 = vector.broadcast %3 : vector<1x1x256xf32> to vector<2x1x256xf32>
    %5 = arith.addf %2, %4 : vector<2x1x256xf32>
    %c0_5 = arith.constant 0 : index
    %c0_6 = arith.constant 0 : index
    %c0_7 = arith.constant 0 : index
    %6 = vector.load %arg4[%c0_5, %c0_6, %c0_7] : memref<2x1x256xf32, #tpu.memory_space<vmem>>, vector<2x1x256xf32>
    tpu.vector_store %arg4[%c0_5, %c0_6, %c0_7], %5 {strides = array<i32>} : memref<2x1x256xf32, #tpu.memory_space<vmem>>, vector<2x1x256xf32>,
    return
  }
  func.func @transform_0(%arg0: i32, %arg1: i32) -> (i32, i32, i32) {
    %c0_i32 = arith.constant 0 : i32
    %c0_i32_0 = arith.constant 0 : i32
    return %arg1, %arg0, %c0_i32 : i32, i32, i32
  }
  func.func @transform_1(%arg0: i32, %arg1: i32) -> (i32, i32, i32) {
    %c0_i32 = arith.constant 0 : i32
    %c0_i32_0 = arith.constant 0 : i32
    %c0_i32_1 = arith.constant 0 : i32
    return %c0_i32, %arg0, %c0_i32_0 : i32, i32, i32
  }
  func.func @transform_2(%arg0: i32, %arg1: i32) -> (i32, i32, i32) {
    %c0_i32 = arith.constant 0 : i32
    %c0_i32_0 = arith.constant 0 : i32
    return %arg1, %arg0, %c0_i32 : i32, i32, i32
  }
}

</mosaic_0001>

<llo_original>
// kernel: tpu_custom_call.1
$region0: #{tpu_custom_call.1}
  #allocation0 [shape = 'u32[]', space=smem, size = 0x4, offset = 0x4, fixed_abs, tag = 'smem constant byte address 0x4 - core index']
  #allocation1 [shape = 'u32[144,128]{1,0:T(1,128)}', space=vmem, size = 0x12000, scoped, tag = 'internal scratch']
  %s0 = inlined_call_operand.hbm [shape: f32[2,1,256], index: 0, kind: input, shape index: {}]
  %s1 = inlined_call_operand.vmem [shape: f32[1,1,256], index: 1, kind: input, shape index: {}]
  %s2 = inlined_call_operand.hbm [shape: f32[2,1,256], index: 2, kind: output, shape index: {}]
  %s3 = sld [smem:[#allocation0]]
  $region22: #{tpu_custom_call.1} parent=0
    _
  %s5 = ssub.s32 1, %s3
  %s6 = scalar_select 0, %s5, %s3
  $region1: #{tpu_custom_call.1} parent=0
    #allocation2 [shape = 'u8[2048]{0}', space=vmem, size = 0x800, scoped, tag = 'input window, operand 0, single buffered']
    #allocation3 [shape = 's32[1]{0}', space=sflag, size = 0x4, scoped, tag = 'scoped memory for tpu_custom_call.1']
    #allocation4 [shape = 's32[1]{0}', space=sflag, size = 0x4, scoped, tag = 'scoped memory for tpu_custom_call.1']
    #allocation5 [shape = 'u8[2048]{0}', space=vmem, size = 0x800, scoped, tag = 'output window, operand 0, single buffered']
    %7 = vsyncpa [#allocation3], 0
    %8 = vsyncpa [#allocation4], 0
    // Predicated region
    $region2: #{tpu_custom_call.1} parent=1 // pred_check
      _
    $region3: #{tpu_custom_call.1} parent=1 // pred_check_branch
      %10 = sbr.rel (0) target = $region5
    $region4: #{tpu_custom_call.1} parent=1 // pred_region
      %s12 = ssub.s32 64, 64
      %13 = vsyncadd [#allocation3], %s12
      %s14 = sshll.u32 [#allocation2], 4
      %s15 = int_to_ptr.vmem [resolvable:$true] %s14
      %20 = dma.hbm_to_vmem [thread:$0]  %s0, 64, %s15, [#allocation3], 32, 32, 2
    $region5: #{tpu_custom_call.1} parent=1 // pred_fallthru
      _
    // Predicated region
    $region6: #{tpu_custom_call.1} parent=1 // pred_check
      _
    $region7: #{tpu_custom_call.1} parent=1 // pred_check_branch
      %22 = sbr.rel (0) target = $region9
    $region8: #{tpu_custom_call.1} parent=1 // pred_region
      _
    $region9: #{tpu_custom_call.1} parent=1 // pred_fallthru
      _
    // Predicated region
    $region10: #{tpu_custom_call.1} parent=1 // pred_check
      _
    $region11: #{tpu_custom_call.1} parent=1 // pred_check_branch
      %24 = sbr.rel (0) target = $region13
    $region12: #{tpu_custom_call.1} parent=1 // pred_region
      %25 = dma.done [#allocation3], 64
    $region13: #{tpu_custom_call.1} parent=1 // pred_fallthru
      _
    %v26 = vld [vmem:[#allocation2] sm:$0x3]
    %v27 = vld [vmem:[#allocation2 + $0x2] sm:$0x3]
    %v28 = vmul.f32 %v26, 5.656854
    %v29 = vmul.f32 %v27, 5.656854
    %v30 = vld [vmem:[%s1] sm:$0x3]
    %v31 = vadd.f32 %v28, %v30
    %v32 = vadd.f32 %v29, %v30
    %v33 = vlaneseq
    %vm34 = vcmp.ge.s32.totalorder %v33, 0
    %vm35 = vcmp.lt.s32.totalorder %v33, 256
    %vm36 = vmand %vm34, %vm35
    %37 = vst.msk [vmem:[#allocation5] sm:$0x3] %vm36, %v31
    %38 = vst.msk [vmem:[#allocation5 + $0x2] sm:$0x3] %vm36, %v32
    // Predicated region
    $region14: #{tpu_custom_call.1} parent=1 // pred_check
      _
    $region15: #{tpu_custom_call.1} parent=1 // pred_check_branch
      %40 = sbr.rel (0) target = $region17
    $region16: #{tpu_custom_call.1} parent=1 // pred_region
      %s42 = ssub.s32 64, 64
      %43 = vsyncadd [#allocation4], %s42
      %s44 = sshll.u32 [#allocation5], 4
      %s45 = int_to_ptr.vmem [resolvable:$true] %s44
      %50 = dma.vmem_to_hbm [thread:$0]  %s45, 64, %s2, [#allocation4], 32, 32, 2
    $region17: #{tpu_custom_call.1} parent=1 // pred_fallthru
      _
    // Predicated region
    $region18: #{tpu_custom_call.1} parent=1 // pred_check
      _
    $region19: #{tpu_custom_call.1} parent=1 // pred_check_branch
      %52 = sbr.rel (0) target = $region21
    $region20: #{tpu_custom_call.1} parent=1 // pred_region
      %53 = dma.done [#allocation4], 64
    $region21: #{tpu_custom_call.1} parent=1 // pred_fallthru
      _
    %54 = vsyncpa [#allocation3], 1
    %55 = vsyncpa [#allocation4], 1

</llo_original>
